<compile_context>
chip_gen: v6e
topology: v6e:2x2x1
jax: 0.10.0
libtpu: 0.0.40
codegen_flags: <defaults>
</compile_context>

<pallas_src>
import functools

import jax
import jax.numpy as jnp
from jax import lax
from jax.experimental import pallas as pl
from jax.experimental.pallas import tpu as pltpu

BN_EPS = 1e-5


def _roll_rows(z, shift):
    """Whole-slab circular row shift: result[r] = z[(r - shift) mod N]."""
    n = z.shape[0]
    s = shift % n
    if s == 0:
        return z
    return jnp.concatenate([z[n - s:, :], z[:n - s, :]], axis=0)


def conv_layer_kernel(x_ref, w_ref, vec_ref, out_ref, act_ref, *, B, L):
    N, Cp = x_ref.shape            # N = B*L rows (channels-last), Cp = 128-padded C
    M = out_ref.shape[0]           # B * L_out
    L_out = M // B

    x = x_ref[...]                 # (N, Cp)
    gamma = vec_ref[0:1, :]        # (1, Cp)  (padded lanes carry gamma=0 -> output 0)
    beta = vec_ref[1:2, :]         # (1, Cp)

    # --- circular per-sequence time shifts (whole slab + per-batch wrap fixup) ---
    r = lax.broadcasted_iota(jnp.int32, (N, Cp), 0)
    t = r % L                                                    # local time index
    x_prev = jnp.where(t == 0, _roll_rows(x, 1 - L), _roll_rows(x, 1))      # x[(t-1) mod L]
    x_next = jnp.where(t == L - 1, _roll_rows(x, L - 1), _roll_rows(x, -1))  # x[(t+1) mod L]

    # --- Conv1d(k=3, circular): ONE fused MXU matmul, K = 3*Cp ---
    xcat = jnp.concatenate([x_prev, x, x_next], axis=1)          # (N, 3*Cp), lane concat
    h = jnp.dot(xcat, w_ref[...], preferred_element_type=jnp.float32)       # (N, Cp)
    # conv bias intentionally omitted: training-mode BN mean-subtraction cancels it.

    # --- BatchNorm1d (training-mode batch stats) folded to per-channel affine ---
    inv_n = 1.0 / float(N)
    s1 = jnp.sum(h, axis=0, keepdims=True)                       # (1, Cp)
    s2 = jnp.sum(h * h, axis=0, keepdims=True)                   # (1, Cp)
    mu = s1 * inv_n
    var = jnp.maximum(s2 * inv_n - mu * mu, 0.0)
    scale = gamma * lax.rsqrt(var + BN_EPS)
    shift = beta - mu * scale
    hn = h * scale + shift

    # --- ELU (alpha = 1) ---
    act = jnp.where(hn > 0, hn, jnp.exp(jnp.minimum(hn, 0.0)) - 1.0)
    act_ref[...] = act                                           # dense VMEM scratch store

    # --- MaxPool1d(k=3, stride=2, padding=1): window centres at even local t ---
    # L even => global rows 2q (q = b*L_out + t') are exactly the window centres.
    cen = act_ref[pl.ds(0, M, 2), :]                             # act[2q]     (centre)
    dn = act_ref[pl.ds(1, M, 2), :]                              # act[2q + 1] (right)
    q = lax.broadcasted_iota(jnp.int32, (M, Cp), 0)
    up = jnp.where(q % L_out == 0, -jnp.inf, _roll_rows(dn, 1))  # act[2q - 1] or left pad
    out_ref[...] = jnp.maximum(jnp.maximum(cen, dn), up)         # one dense lane-aligned store


def conv_layer_forward(x, w_taps, conv_b, gamma, beta):
    """x: (B, L, C) channels-last -> (B, L_out, C); matches ConvLayer.forward.

    conv_b is accepted for interface fidelity but is analytically cancelled by the
    training-mode BatchNorm mean subtraction, so it is not sent to the kernel.
    """
    del conv_b
    B, L, C = x.shape
    assert L % 2 == 0, "stride-2 pooling shortcut assumes even L"
    L_out = (L + 2 - 3) // 2 + 1
    Cp = -(-C // 128) * 128                                      # lane-dense channel pad

    # layout plumbing only (host side): flatten batch*time, pad channels to Cp
    x2 = x.reshape(B * L, C).astype(jnp.float32)
    w3 = w_taps.reshape(3, C, C).astype(jnp.float32)             # taps k=0,1,2 (x[t-1],x[t],x[t+1])
    vec = jnp.stack([gamma, beta], axis=0).astype(jnp.float32)   # (2, C) packed BN params
    if Cp != C:
        x2 = jnp.pad(x2, ((0, 0), (0, Cp - C)))
        w3 = jnp.pad(w3, ((0, 0), (0, Cp - C), (0, Cp - C)))
        vec = jnp.pad(vec, ((0, 0), (0, Cp - C)))                # gamma pad = 0 -> dead lanes stay 0
    w_p = w3.reshape(3 * Cp, Cp)                                 # stacked fused-matmul weight

    vmem = pltpu.MemorySpace.VMEM
    out2 = pl.pallas_call(
        functools.partial(conv_layer_kernel, B=B, L=L),
        out_shape=jax.ShapeDtypeStruct((B * L_out, Cp), jnp.float32),
        in_specs=[pl.BlockSpec(memory_space=vmem) for _ in range(3)],
        out_specs=pl.BlockSpec(memory_space=vmem),
        scratch_shapes=[pltpu.VMEM((B * L, Cp), jnp.float32)],   # post-ELU slab for strided pool reads
    )(x2, w_p, vec)
    return out2[:, :C].reshape(B, L_out, C)


def conv_layer_reference(x, w_taps, conv_b, gamma, beta):
    """Pure-JAX reference of the same forward pass (for validation)."""
    B, L, C = x.shape
    xp = jnp.concatenate([x[:, -1:, :], x, x[:, :1, :]], axis=1)  # circular pad = 1
    h = conv_b
    for k in range(3):
        h = h + jnp.einsum('blc,cd->bld', xp[:, k:k + L, :], w_taps[k * C:(k + 1) * C, :],
                           precision=lax.Precision.HIGHEST)
    mu = h.mean(axis=(0, 1), keepdims=True)
    var = ((h - mu) ** 2).mean(axis=(0, 1), keepdims=True)
    hn = (h - mu) / jnp.sqrt(var + BN_EPS) * gamma + beta
    act = jnp.where(hn > 0, hn, jnp.exp(jnp.minimum(hn, 0.0)) - 1.0)
    return lax.reduce_window(act, -jnp.inf, lax.max,
                             window_dimensions=(1, 3, 1), window_strides=(1, 2, 1),
                             padding=((0, 0), (1, 1), (0, 0)))


if __name__ == "__main__":
    # ConvLayer(c_in=32) on x of shape (batch=2, seq_len=16, channels=32).
    B, L, C = 2, 16, 32
    key = jax.random.PRNGKey(0)
    kx, kw, kb, kg, kbeta = jax.random.split(key, 5)
    x = jax.random.normal(kx, (B, L, C), dtype=jnp.float32)
    # w_taps rows [0:C)/[C:2C)/[2C:3C) are the k=0/1/2 taps of the torch Conv1d
    # weight (C_out, C_in, 3), transposed to (c_in, c_out) so y = x @ W_k.
    w_taps = (0.2 * jax.random.normal(kw, (3 * C, C))).astype(jnp.float32)
    conv_b = (0.1 * jax.random.normal(kb, (C,))).astype(jnp.float32)
    gamma = (1.0 + 0.1 * jax.random.normal(kg, (C,))).astype(jnp.float32)
    beta = (0.1 * jax.random.normal(kbeta, (C,))).astype(jnp.float32)

    out = jax.block_until_ready(conv_layer_forward(x, w_taps, conv_b, gamma, beta))
    ref = conv_layer_reference(x, w_taps, conv_b, gamma, beta)

    L_out = (L + 2 - 3) // 2 + 1
    assert out.shape == (B, L_out, C), out.shape
    max_err = float(jnp.max(jnp.abs(out - ref)))
    assert max_err < 1e-3, f"mismatch vs reference: {max_err}"
    print("KERNEL_OK")
</pallas_src>

<mosaic_0001>
module attributes {stable_mosaic.version = 11 : i64} {
  func.func @conv_layer_kernel(%arg0: memref<32x128xf32, #tpu.memory_space<vmem>>, %arg1: memref<384x128xf32, #tpu.memory_space<vmem>>, %arg2: memref<2x128xf32, #tpu.memory_space<vmem>>, %arg3: memref<16x128xf32, #tpu.memory_space<vmem>>, %arg4: memref<32x128xf32, #tpu.memory_space<vmem>>) attributes {dimension_semantics = [], scalar_prefetch = 0 : i64, scratch_operands = 1 : i64, tpu.core_type = #tpu.core_type<tc>} {
    %c0 = arith.constant 0 : index
    %c0_0 = arith.constant 0 : index
    %0 = vector.load %arg0[%c0, %c0_0] : memref<32x128xf32, #tpu.memory_space<vmem>>, vector<32x128xf32>
    %c0_1 = arith.constant 0 : index
    %c0_2 = arith.constant 0 : index
    %1 = vector.load %arg2[%c0_1, %c0_2] : memref<2x128xf32, #tpu.memory_space<vmem>>, vector<1x128xf32>
    %c1 = arith.constant 1 : index
    %c0_3 = arith.constant 0 : index
    %2 = vector.load %arg2[%c1, %c0_3] : memref<2x128xf32, #tpu.memory_space<vmem>>, vector<1x128xf32>
    %3 = tpu.iota {dimensions = array<i32: 0>} : vector<32x128xi32>
    %c16_i32 = arith.constant 16 : i32
    %c0_i32 = arith.constant 0 : i32
    %4 = arith.cmpi eq, %c16_i32, %c0_i32 : i32
    %c1_i32 = arith.constant 1 : i32
    %5 = arith.select %4, %c1_i32, %c16_i32 : i32
    %6 = vector.broadcast %5 : i32 to vector<32x128xi32>
    %7 = arith.remsi %3, %6 : vector<32x128xi32>
    %c0_i32_4 = arith.constant 0 : i32
    %8 = vector.broadcast %c0_i32_4 : i32 to vector<32x128xi32>
    %9 = arith.cmpi ne, %7, %8 : vector<32x128xi32>
    %c0_i32_5 = arith.constant 0 : i32
    %10 = vector.broadcast %c0_i32_5 : i32 to vector<32x128xi32>
    %11 = arith.cmpi slt, %7, %10 : vector<32x128xi32>
    %c0_i32_6 = arith.constant 0 : i32
    %12 = arith.cmpi slt, %5, %c0_i32_6 : i32
    %13 = vector.broadcast %12 : i1 to vector<32x128xi1>
    %14 = vector.broadcast %13 : vector<32x128xi1> to vector<32x128xi1>
    %15 = arith.xori %11, %14 : vector<32x128xi1>
    %16 = arith.andi %15, %9 : vector<32x128xi1>
    %17 = vector.broadcast %5 : i32 to vector<32x128xi32>
    %18 = arith.addi %7, %17 : vector<32x128xi32>
    %19 = arith.select %16, %18, %7 : vector<32x128xi1>, vector<32x128xi32>
    %c0_i32_7 = arith.constant 0 : i32
    %20 = vector.broadcast %c0_i32_7 : i32 to vector<32x128xi32>
    %21 = arith.cmpi eq, %19, %20 : vector<32x128xi32>
    %22 = vector.extract_strided_slice %0 {offsets = [15, 0], sizes = [17, 128], strides = [1, 1]} : vector<32x128xf32> to vector<17x128xf32>
    %23 = vector.extract_strided_slice %0 {offsets = [0, 0], sizes = [15, 128], strides = [1, 1]} : vector<32x128xf32> to vector<15x128xf32>
    %24 = tpu.concatenate %22, %23 in 0 : vector<17x128xf32>, vector<15x128xf32> -> vector<32x128xf32>
    %25 = vector.extract_strided_slice %0 {offsets = [31, 0], sizes = [1, 128], strides = [1, 1]} : vector<32x128xf32> to vector<1x128xf32>
    %26 = vector.extract_strided_slice %0 {offsets = [0, 0], sizes = [31, 128], strides = [1, 1]} : vector<32x128xf32> to vector<31x128xf32>
    %27 = tpu.concatenate %25, %26 in 0 : vector<1x128xf32>, vector<31x128xf32> -> vector<32x128xf32>
    %28 = arith.select %21, %24, %27 : vector<32x128xi1>, vector<32x128xf32>
    %c15_i32 = arith.constant 15 : i32
    %29 = vector.broadcast %c15_i32 : i32 to vector<32x128xi32>
    %30 = arith.cmpi eq, %19, %29 : vector<32x128xi32>
    %31 = vector.extract_strided_slice %0 {offsets = [17, 0], sizes = [15, 128], strides = [1, 1]} : vector<32x128xf32> to vector<15x128xf32>
    %32 = vector.extract_strided_slice %0 {offsets = [0, 0], sizes = [17, 128], strides = [1, 1]} : vector<32x128xf32> to vector<17x128xf32>
    %33 = tpu.concatenate %31, %32 in 0 : vector<15x128xf32>, vector<17x128xf32> -> vector<32x128xf32>
    %34 = vector.extract_strided_slice %0 {offsets = [1, 0], sizes = [31, 128], strides = [1, 1]} : vector<32x128xf32> to vector<31x128xf32>
    %35 = vector.extract_strided_slice %0 {offsets = [0, 0], sizes = [1, 128], strides = [1, 1]} : vector<32x128xf32> to vector<1x128xf32>
    %36 = tpu.concatenate %34, %35 in 0 : vector<31x128xf32>, vector<1x128xf32> -> vector<32x128xf32>
    %37 = arith.select %30, %33, %36 : vector<32x128xi1>, vector<32x128xf32>
    %38 = tpu.concatenate %28, %0, %37 in 1 : vector<32x128xf32>, vector<32x128xf32>, vector<32x128xf32> -> vector<32x384xf32>
    %c0_8 = arith.constant 0 : index
    %c0_9 = arith.constant 0 : index
    %39 = vector.load %arg1[%c0_8, %c0_9] : memref<384x128xf32, #tpu.memory_space<vmem>>, vector<384x128xf32>
    %cst = arith.constant dense<0.000000e+00> : vector<32x128xf32>
    %40 = tpu.matmul %38, %39, %cst {dimension_numbers = #tpu.dot_dimension_numbers<[1], [0], [0], [1], [0, 0, 1, 1], [], []>} : vector<32x384xf32>, vector<384x128xf32>, vector<32x128xf32> -> vector<32x128xf32>
    %cst_10 = arith.constant dense<0.000000e+00> : vector<128xf32>
    %41 = vector.multi_reduction <add>, %40, %cst_10 [0] : vector<32x128xf32> to vector<128xf32>
    %42 = vector.shape_cast %41 : vector<128xf32> to vector<1x128xf32>
    %43 = arith.mulf %40, %40 : vector<32x128xf32>
    %cst_11 = arith.constant dense<0.000000e+00> : vector<128xf32>
    %44 = vector.multi_reduction <add>, %43, %cst_11 [0] : vector<32x128xf32> to vector<128xf32>
    %45 = vector.shape_cast %44 : vector<128xf32> to vector<1x128xf32>
    %cst_12 = arith.constant 3.125000e-02 : f32
    %46 = vector.broadcast %cst_12 : f32 to vector<1x128xf32>
    %47 = arith.mulf %42, %46 : vector<1x128xf32>
    %cst_13 = arith.constant 3.125000e-02 : f32
    %48 = vector.broadcast %cst_13 : f32 to vector<1x128xf32>
    %49 = arith.mulf %45, %48 : vector<1x128xf32>
    %50 = arith.mulf %47, %47 : vector<1x128xf32>
    %51 = arith.subf %49, %50 : vector<1x128xf32>
    %cst_14 = arith.constant 0.000000e+00 : f32
    %52 = vector.broadcast %cst_14 : f32 to vector<1x128xf32>
    %53 = arith.maximumf %51, %52 : vector<1x128xf32>
    %cst_15 = arith.constant 9.99999974E-6 : f32
    %54 = vector.broadcast %cst_15 : f32 to vector<1x128xf32>
    %55 = arith.addf %53, %54 : vector<1x128xf32>
    %56 = math.rsqrt %55 : vector<1x128xf32>
    %57 = arith.mulf %1, %56 : vector<1x128xf32>
    %58 = arith.mulf %47, %57 : vector<1x128xf32>
    %59 = arith.subf %2, %58 : vector<1x128xf32>
    %60 = vector.broadcast %57 : vector<1x128xf32> to vector<32x128xf32>
    %61 = arith.mulf %40, %60 : vector<32x128xf32>
    %62 = vector.broadcast %59 : vector<1x128xf32> to vector<32x128xf32>
    %63 = arith.addf %61, %62 : vector<32x128xf32>
    %cst_16 = arith.constant 0.000000e+00 : f32
    %64 = vector.broadcast %cst_16 : f32 to vector<32x128xf32>
    %65 = arith.cmpf ogt, %63, %64 : vector<32x128xf32>
    %cst_17 = arith.constant 0.000000e+00 : f32
    %66 = vector.broadcast %cst_17 : f32 to vector<32x128xf32>
    %67 = arith.minimumf %63, %66 : vector<32x128xf32>
    %68 = math.exp %67 : vector<32x128xf32>
    %cst_18 = arith.constant 1.000000e+00 : f32
    %69 = vector.broadcast %cst_18 : f32 to vector<32x128xf32>
    %70 = arith.subf %68, %69 : vector<32x128xf32>
    %71 = arith.select %65, %63, %70 : vector<32x128xi1>, vector<32x128xf32>
    %c0_19 = arith.constant 0 : index
    %c0_20 = arith.constant 0 : index
    %72 = vector.load %arg4[%c0_19, %c0_20] : memref<32x128xf32, #tpu.memory_space<vmem>>, vector<32x128xf32>
    tpu.vector_store %arg4[%c0_19, %c0_20], %71 {strides = array<i32>} : memref<32x128xf32, #tpu.memory_space<vmem>>, vector<32x128xf32>,
    %c0_21 = arith.constant 0 : index
    %c0_22 = arith.constant 0 : index
    %73 = tpu.strided_load %arg4[%c0_21, %c0_22] {strides = array<i32: 2, 1>} : memref<32x128xf32, #tpu.memory_space<vmem>>, vector<16x128xf32>
    %c1_23 = arith.constant 1 : index
    %c0_24 = arith.constant 0 : index
    %74 = tpu.strided_load %arg4[%c1_23, %c0_24] {strides = array<i32: 2, 1>} : memref<32x128xf32, #tpu.memory_space<vmem>>, vector<16x128xf32>
    %75 = tpu.iota {dimensions = array<i32: 0>} : vector<16x128xi32>
    %c8_i32 = arith.constant 8 : i32
    %c0_i32_25 = arith.constant 0 : i32
    %76 = arith.cmpi eq, %c8_i32, %c0_i32_25 : i32
    %c1_i32_26 = arith.constant 1 : i32
    %77 = arith.select %76, %c1_i32_26, %c8_i32 : i32
    %78 = vector.broadcast %77 : i32 to vector<16x128xi32>
    %79 = arith.remsi %75, %78 : vector<16x128xi32>
    %c0_i32_27 = arith.constant 0 : i32
    %80 = vector.broadcast %c0_i32_27 : i32 to vector<16x128xi32>
    %81 = arith.cmpi ne, %79, %80 : vector<16x128xi32>
    %c0_i32_28 = arith.constant 0 : i32
    %82 = vector.broadcast %c0_i32_28 : i32 to vector<16x128xi32>
    %83 = arith.cmpi slt, %79, %82 : vector<16x128xi32>
    %c0_i32_29 = arith.constant 0 : i32
    %84 = arith.cmpi slt, %77, %c0_i32_29 : i32
    %85 = vector.broadcast %84 : i1 to vector<16x128xi1>
    %86 = vector.broadcast %85 : vector<16x128xi1> to vector<16x128xi1>
    %87 = arith.xori %83, %86 : vector<16x128xi1>
    %88 = arith.andi %87, %81 : vector<16x128xi1>
    %89 = vector.broadcast %77 : i32 to vector<16x128xi32>
    %90 = arith.addi %79, %89 : vector<16x128xi32>
    %91 = arith.select %88, %90, %79 : vector<16x128xi1>, vector<16x128xi32>
    %c0_i32_30 = arith.constant 0 : i32
    %92 = vector.broadcast %c0_i32_30 : i32 to vector<16x128xi32>
    %93 = arith.cmpi eq, %91, %92 : vector<16x128xi32>
    %94 = vector.extract_strided_slice %74 {offsets = [15, 0], sizes = [1, 128], strides = [1, 1]} : vector<16x128xf32> to vector<1x128xf32>
    %95 = vector.extract_strided_slice %74 {offsets = [0, 0], sizes = [15, 128], strides = [1, 1]} : vector<16x128xf32> to vector<15x128xf32>
    %96 = tpu.concatenate %94, %95 in 0 : vector<1x128xf32>, vector<15x128xf32> -> vector<16x128xf32>
    %cst_31 = arith.constant 0xFF800000 : f32
    %97 = vector.broadcast %cst_31 : f32 to vector<16x128xf32>
    %98 = arith.select %93, %97, %96 : vector<16x128xi1>, vector<16x128xf32>
    %99 = arith.maximumf %73, %74 : vector<16x128xf32>
    %100 = arith.maximumf %99, %98 : vector<16x128xf32>
    %c0_32 = arith.constant 0 : index
    %c0_33 = arith.constant 0 : index
    %101 = vector.load %arg3[%c0_32, %c0_33] : memref<16x128xf32, #tpu.memory_space<vmem>>, vector<16x128xf32>
    tpu.vector_store %arg3[%c0_32, %c0_33], %100 {strides = array<i32>} : memref<16x128xf32, #tpu.memory_space<vmem>>, vector<16x128xf32>,
    return
  }
}

</mosaic_0001>

<llo_original>
// kernel: tpu_custom_call.1
$region0: #{tpu_custom_call.1}
  #allocation0 [shape = 'u32[]', space=smem, size = 0x4, offset = 0x4, fixed_abs, tag = 'smem constant byte address 0x4 - core index']
  #allocation1 [shape = 'u32[144,128]{1,0:T(1,128)}', space=vmem, size = 0x12000, scoped, tag = 'internal scratch']
  #allocation2 [shape = 'f32[32,128]{1,0:T(8,128)}', space=vmem, size = 0x4000, scoped, tag = 'scratch operand']
  %s0 = inlined_call_operand.hbm [shape: f32[32,128], index: 0, kind: input, shape index: {}]
  %s1 = inlined_call_operand.hbm [shape: f32[384,128], index: 1, kind: input, shape index: {}]
  %s2 = inlined_call_operand.vmem [shape: f32[2,128], index: 2, kind: input, shape index: {}]
  %s3 = inlined_call_operand.hbm [shape: f32[16,128], index: 3, kind: output, shape index: {}]
  %s4 = sld [smem:[#allocation0]]
  $region30: #{tpu_custom_call.1} parent=0
    _
  %s6 = ssub.s32 1, %s4
  %s7 = scalar_select 0, %s6, %s4
  $region1: #{tpu_custom_call.1} parent=0
    #allocation3 [shape = 'u8[16384]{0}', space=vmem, size = 0x4000, scoped, tag = 'input window, operand 0, single buffered']
    #allocation4 [shape = 's32[1]{0}', space=sflag, size = 0x4, scoped, tag = 'scoped memory for tpu_custom_call.1']
    #allocation5 [shape = 's32[1]{0}', space=sflag, size = 0x4, scoped, tag = 'scoped memory for tpu_custom_call.1']
    #allocation6 [shape = 'u8[196608]{0}', space=vmem, size = 0x30000, scoped, tag = 'input window, operand 1, single buffered']
    #allocation7 [shape = 's32[1]{0}', space=sflag, size = 0x4, scoped, tag = 'scoped memory for tpu_custom_call.1']
    #allocation8 [shape = 'u8[8192]{0}', space=vmem, size = 0x2000, scoped, tag = 'output window, operand 0, single buffered']
    %8 = vsyncpa [#allocation4], 0
    %9 = vsyncpa [#allocation7], 0
    %10 = vsyncpa [#allocation5], 0
    // Predicated region
    $region2: #{tpu_custom_call.1} parent=1 // pred_check
      _
    $region3: #{tpu_custom_call.1} parent=1 // pred_check_branch
      %12 = sbr.rel (0) target = $region5
    $region4: #{tpu_custom_call.1} parent=1 // pred_region
      %s14 = ssub.s32 512, 512
      %15 = vsyncadd [#allocation4], %s14
      %s16 = sshll.u32 [#allocation3], 4
      %s17 = int_to_ptr.vmem [resolvable:$true] %s16
      %22 = dma.hbm_to_vmem [thread:$0]  %s0, 512, %s17, [#allocation4], 128, 128, 8
    $region5: #{tpu_custom_call.1} parent=1 // pred_fallthru
      _
    // Predicated region
    $region6: #{tpu_custom_call.1} parent=1 // pred_check
      _
    $region7: #{tpu_custom_call.1} parent=1 // pred_check_branch
      %24 = sbr.rel (0) target = $region9
    $region8: #{tpu_custom_call.1} parent=1 // pred_region
      %s26 = ssub.s32 6144, 6144
      %27 = vsyncadd [#allocation7], %s26
      %s28 = sshll.u32 [#allocation6], 4
      %s29 = int_to_ptr.vmem [resolvable:$true] %s28
      %34 = dma.hbm_to_vmem [thread:$0]  %s1, 6144, %s29, [#allocation7], 128, 128, 8
    $region9: #{tpu_custom_call.1} parent=1 // pred_fallthru
      _
    // Predicated region
    $region10: #{tpu_custom_call.1} parent=1 // pred_check
      _
    $region11: #{tpu_custom_call.1} parent=1 // pred_check_branch
      %36 = sbr.rel (0) target = $region13
    $region12: #{tpu_custom_call.1} parent=1 // pred_region
      _
    $region13: #{tpu_custom_call.1} parent=1 // pred_fallthru
      _
    // Predicated region
    $region14: #{tpu_custom_call.1} parent=1 // pred_check
      _
    $region15: #{tpu_custom_call.1} parent=1 // pred_check_branch
      %38 = sbr.rel (0) target = $region17
    $region16: #{tpu_custom_call.1} parent=1 // pred_region
      %39 = dma.done [#allocation4], 512
    $region17: #{tpu_custom_call.1} parent=1 // pred_fallthru
      _
    // Predicated region
    $region18: #{tpu_custom_call.1} parent=1 // pred_check
      _
    $region19: #{tpu_custom_call.1} parent=1 // pred_check_branch
      %41 = sbr.rel (0) target = $region21
    $region20: #{tpu_custom_call.1} parent=1 // pred_region
      %42 = dma.done [#allocation7], 6144
    $region21: #{tpu_custom_call.1} parent=1 // pred_fallthru
      _
    %v43 = vld [vmem:[#allocation3] sm:$0xff]
    %v44 = vld [vmem:[#allocation3 + $0x8] sm:$0xff]
    %v45 = vld [vmem:[#allocation3 + $0x10] sm:$0xff]
    %v46 = vld [vmem:[#allocation3 + $0x18] sm:$0xff]
    %v47 = vld [vmem:[%s2] sm:$0x1]
    %v48 = vld [vmem:[%s2 + $0x1] sm:$0x1]
    %v49 = vlaneseq
    %v50 = vshrl.u32 %v49, 7
    %v51 = vadd.s32 %v50, 8
    %v52 = vadd.s32 %v50, 16
    %v53 = vadd.s32 %v50, 24
    %vm54 = vcmp.lt.s32.totalorder %v50, 0
    %v55 = vsub.s32 0, %v50
    %v56 = vsel %vm54, %v55, %v50
    %v57 = vshrl.u32 %v56, 4
    %v58 = vand.u32 %v56, 15
    %v59 = vsub.s32 0, %v58
    %v60 = vsel %vm54, %v59, %v58
    %vm61 = vcmp.lt.s32.totalorder %v51, 0
    %v62 = vsub.s32 0, %v51
    %v63 = vsel %vm61, %v62, %v51
    %v64 = vshrl.u32 %v63, 4
    %v65 = vand.u32 %v63, 15
    %v66 = vsub.s32 0, %v65
    %v67 = vsel %vm61, %v66, %v65
    %vm68 = vcmp.lt.s32.totalorder %v52, 0
    %v69 = vsub.s32 0, %v52
    %v70 = vsel %vm68, %v69, %v52
    %v71 = vshrl.u32 %v70, 4
    %v72 = vand.u32 %v70, 15
    %v73 = vsub.s32 0, %v72
    %v74 = vsel %vm68, %v73, %v72
    %vm75 = vcmp.lt.s32.totalorder %v53, 0
    %v76 = vsub.s32 0, %v53
    %v77 = vsel %vm75, %v76, %v53
    %v78 = vshrl.u32 %v77, 4
    %v79 = vand.u32 %v77, 15
    %v80 = vsub.s32 0, %v79
    %v81 = vsel %vm75, %v80, %v79
    %vm82 = vcmp.ne.s32.totalorder %v60, 0
    %vm83 = vcmp.ne.s32.totalorder %v67, 0
    %vm84 = vcmp.ne.s32.totalorder %v74, 0
    %vm85 = vcmp.ne.s32.totalorder %v81, 0
    %vm86 = vcmp.lt.s32.totalorder %v60, 0
    %vm87 = vcmp.lt.s32.totalorder %v67, 0
    %vm88 = vcmp.lt.s32.totalorder %v74, 0
    %vm89 = vcmp.lt.s32.totalorder %v81, 0
    %vm90 = vmand %vm86, %vm82
    %vm91 = vmand %vm87, %vm83
    %vm92 = vmand %vm88, %vm84
    %vm93 = vmand %vm89, %vm85
    %v94 = vadd.s32 %v60, 16
    %v95 = vadd.s32 %v67, 16
    %v96 = vadd.s32 %v74, 16
    %v97 = vadd.s32 %v81, 16
    %v98 = vsel %vm90, %v94, %v60
    %v99 = vsel %vm91, %v95, %v67
    %v100 = vsel %vm92, %v96, %v74
    %v101 = vsel %vm93, %v97, %v81
    %vm102 = vcmp.eq.s32.totalorder %v98, 0
    %vm103 = vcmp.eq.s32.totalorder %v99, 0
    %vm104 = vcmp.eq.s32.totalorder %v100, 0
    %vm105 = vcmp.eq.s32.totalorder %v101, 0
    %vm109 = vcmask 1040384
    %v110 = vrot.slane %v44, 7
    %v111 = vrot.slane %v45, 7
    %v112 = vsel %vm109, %v110, %v111
    %v113 = vrot.slane %v46, 7
    %v114 = vsel %vm109, %v111, %v113
    %v119 = vrot.slane %v43, 7
    %v120 = vsel %vm109, %v119, %v110
    %v123 = vsel %vm109, %v113, %v119
    %v124 = vsel %vm102, %v112, %v123
    %v125 = vsel %vm103, %v114, %v120
    %v126 = vsel %vm104, %v123, %v112
    %v127 = vsel %vm105, %v120, %v114
    %vm128 = vcmp.eq.s32.totalorder %v98, 15
    %vm129 = vcmp.eq.s32.totalorder %v99, 15
    %vm130 = vcmp.eq.s32.totalorder %v100, 15
    %vm131 = vcmp.eq.s32.totalorder %v101, 15
    %vm132 = vcmask 1046528
    %v133 = vrot.slane %v45, 1
    %v134 = vrot.slane %v46, 1
    %v135 = vsel %vm132, %v133, %v134
    %v138 = vrot.slane %v43, 1
    %v139 = vrot.slane %v44, 1
    %v140 = vsel %vm132, %v138, %v139
    %v141 = vsel %vm132, %v139, %v133
    %v145 = vsel %vm132, %v134, %v138
    %v146 = vsel %vm128, %v135, %v140
    %v147 = vsel %vm129, %v145, %v141
    %v148 = vsel %vm130, %v140, %v135
    %v149 = vsel %vm131, %v141, %v145
    %v150 = vld [vmem:[#allocation6] sm:$0xff]
    %v151 = vld [vmem:[#allocation6 + $0x8] sm:$0xff]
    %v152 = vld [vmem:[#allocation6 + $0x10] sm:$0xff]
    %v153 = vld [vmem:[#allocation6 + $0x18] sm:$0xff]
    %v154 = vld [vmem:[#allocation6 + $0x20] sm:$0xff]
    %v155 = vld [vmem:[#allocation6 + $0x28] sm:$0xff]
    %v156 = vld [vmem:[#allocation6 + $0x30] sm:$0xff]
    %v157 = vld [vmem:[#allocation6 + $0x38] sm:$0xff]
    %v158 = vld [vmem:[#allocation6 + $0x40] sm:$0xff]
    %v159 = vld [vmem:[#allocation6 + $0x48] sm:$0xff]
    %v160 = vld [vmem:[#allocation6 + $0x50] sm:$0xff]
    %v161 = vld [vmem:[#allocation6 + $0x58] sm:$0xff]
    %v162 = vld [vmem:[#allocation6 + $0x60] sm:$0xff]
    %v163 = vld [vmem:[#allocation6 + $0x68] sm:$0xff]
    %v164 = vld [vmem:[#allocation6 + $0x70] sm:$0xff]
    %v165 = vld [vmem:[#allocation6 + $0x78] sm:$0xff]
    %v166 = vld [vmem:[#allocation6 + $0x80] sm:$0xff]
    %v167 = vld [vmem:[#allocation6 + $0x88] sm:$0xff]
    %v168 = vld [vmem:[#allocation6 + $0x90] sm:$0xff]
    %v169 = vld [vmem:[#allocation6 + $0x98] sm:$0xff]
    %v170 = vld [vmem:[#allocation6 + $0xa0] sm:$0xff]
    %v171 = vld [vmem:[#allocation6 + $0xa8] sm:$0xff]
    %v172 = vld [vmem:[#allocation6 + $0xb0] sm:$0xff]
    %v173 = vld [vmem:[#allocation6 + $0xb8] sm:$0xff]
    %v174 = vld [vmem:[#allocation6 + $0xc0] sm:$0xff]
    %v175 = vld [vmem:[#allocation6 + $0xc8] sm:$0xff]
    %v176 = vld [vmem:[#allocation6 + $0xd0] sm:$0xff]
    %v177 = vld [vmem:[#allocation6 + $0xd8] sm:$0xff]
    %v178 = vld [vmem:[#allocation6 + $0xe0] sm:$0xff]
    %v179 = vld [vmem:[#allocation6 + $0xe8] sm:$0xff]
    %v180 = vld [vmem:[#allocation6 + $0xf0] sm:$0xff]
    %v181 = vld [vmem:[#allocation6 + $0xf8] sm:$0xff]
    %v182 = vld [vmem:[#allocation6 + $0x100] sm:$0xff]
    %v183 = vld [vmem:[#allocation6 + $0x108] sm:$0xff]
    %v184 = vld [vmem:[#allocation6 + $0x110] sm:$0xff]
    %v185 = vld [vmem:[#allocation6 + $0x118] sm:$0xff]
    %v186 = vld [vmem:[#allocation6 + $0x120] sm:$0xff]
    %v187 = vld [vmem:[#allocation6 + $0x128] sm:$0xff]
    %v188 = vld [vmem:[#allocation6 + $0x130] sm:$0xff]
    %v189 = vld [vmem:[#allocation6 + $0x138] sm:$0xff]
    %v190 = vld [vmem:[#allocation6 + $0x140] sm:$0xff]
    %v191 = vld [vmem:[#allocation6 + $0x148] sm:$0xff]
    %v192 = vld [vmem:[#allocation6 + $0x150] sm:$0xff]
    %v193 = vld [vmem:[#allocation6 + $0x158] sm:$0xff]
    %v194 = vld [vmem:[#allocation6 + $0x160] sm:$0xff]
    %v195 = vld [vmem:[#allocation6 + $0x168] sm:$0xff]
    %v196 = vld [vmem:[#allocation6 + $0x170] sm:$0xff]
    %v197 = vld [vmem:[#allocation6 + $0x178] sm:$0xff]
    %198 = vmatprep.subr.mxu0 0.0
    %199 = vmatpush1.msra.mxu0 %v165
    %200 = vmatprep.subr.mxu0 0.0
    %201 = vmatpush1.msra.mxu0 %v164
    %202 = vmatprep.subr.mxu0 0.0
    %203 = vmatpush1.msra.mxu0 %v163
    %204 = vmatprep.subr.mxu0 0.0
    %205 = vmatpush1.msra.mxu0 %v162
    %206 = vmatprep.subr.mxu0 0.0
    %207 = vmatpush1.msra.mxu0 %v161
    %208 = vmatprep.subr.mxu0 0.0
    %209 = vmatpush1.msra.mxu0 %v160
    %210 = vmatprep.subr.mxu0 0.0
    %211 = vmatpush1.msra.mxu0 %v159
    %212 = vmatprep.subr.mxu0 0.0
    %213 = vmatpush1.msra.mxu0 %v158
    %214 = vmatprep.subr.mxu0 0.0
    %215 = vmatpush1.msra.mxu0 %v157
    %216 = vmatprep.subr.mxu0 0.0
    %217 = vmatpush1.msra.mxu0 %v156
    %218 = vmatprep.subr.mxu0 0.0
    %219 = vmatpush1.msra.mxu0 %v155
    %220 = vmatprep.subr.mxu0 0.0
    %221 = vmatpush1.msra.mxu0 %v154
    %222 = vmatprep.subr.mxu0 0.0
    %223 = vmatpush1.msra.mxu0 %v153
    %224 = vmatprep.subr.mxu0 0.0
    %225 = vmatpush1.msra.mxu0 %v152
    %226 = vmatprep.subr.mxu0 0.0
    %227 = vmatpush1.msra.mxu0 %v151
    %228 = vmatprep.subr.mxu0 0.0
    %229 = vmatpush1.msra.mxu0 %v150
    %230 = vmatprep.subr.mxu0 0.0
    %231 = vmatpush2.msra.mxu0 %v181
    %232 = vmatprep.subr.mxu0 0.0
    %233 = vmatpush2.msra.mxu0 %v180
    %234 = vmatprep.subr.mxu0 0.0
    %235 = vmatpush2.msra.mxu0 %v179
    %236 = vmatprep.subr.mxu0 0.0
    %237 = vmatpush2.msra.mxu0 %v178
    %238 = vmatprep.subr.mxu0 0.0
    %239 = vmatpush2.msra.mxu0 %v177
    %240 = vmatprep.subr.mxu0 0.0
    %241 = vmatpush2.msra.mxu0 %v176
    %242 = vmatprep.subr.mxu0 0.0
    %243 = vmatpush2.msra.mxu0 %v175
    %244 = vmatprep.subr.mxu0 0.0
    %245 = vmatpush2.msra.mxu0 %v174
    %246 = vmatprep.subr.mxu0 0.0
    %247 = vmatpush2.msra.mxu0 %v173
    %248 = vmatprep.subr.mxu0 0.0
    %249 = vmatpush2.msra.mxu0 %v172
    %250 = vmatprep.subr.mxu0 0.0
    %251 = vmatpush2.msra.mxu0 %v171
    %252 = vmatprep.subr.mxu0 0.0
    %253 = vmatpush2.msra.mxu0 %v170
    %254 = vmatprep.subr.mxu0 0.0
    %255 = vmatpush2.msra.mxu0 %v169
    %256 = vmatprep.subr.mxu0 0.0
    %257 = vmatpush2.msra.mxu0 %v168
    %258 = vmatprep.subr.mxu0 0.0
    %259 = vmatpush2.msra.mxu0 %v167
    %260 = vmatprep.subr.mxu0 0.0
    %261 = vmatpush2.msra.mxu0 %v166
    %262 = vmatprep.mubr.f32.mxu0 %v43
    %263 = vmatmul.mubr.f32.gmra.mxu0 %v124
    %v264 = vpop.f32.mrf.mxu0
    %v265 = vadd.f32 0.0, %v264
    %v266 = vpop.f32.mrf.mxu0
    %267 = vmatprep.mubr.f32.mxu0 %v44
    %268 = vmatmul.mubr.f32.gmra.mxu0 %v125
    %v269 = vpop.f32.mrf.mxu0
    %v270 = vadd.f32 0.0, %v269
    %v271 = vpop.f32.mrf.mxu0
    %272 = vmatprep.mubr.f32.mxu0 %v45
    %273 = vmatmul.mubr.f32.gmra.mxu0 %v126
    %v274 = vpop.f32.mrf.mxu0
    %v275 = vadd.f32 0.0, %v274
    %v276 = vpop.f32.mrf.mxu0
    %277 = vmatprep.mubr.f32.mxu0 %v46
    %278 = vmatmul.mubr.f32.gmra.mxu0 %v127
    %v279 = vpop.f32.mrf.mxu0
    %v280 = vadd.f32 0.0, %v279
    %v281 = vpop.f32.mrf.mxu0
    %282 = vdwg.mxu0
    %283 = vmatprep.subr.mxu0 0.0
    %284 = vmatpush1.msra.mxu0 %v197
    %285 = vmatprep.subr.mxu0 0.0
    %286 = vmatpush1.msra.mxu0 %v196
    %287 = vmatprep.subr.mxu0 0.0
    %288 = vmatpush1.msra.mxu0 %v195
    %289 = vmatprep.subr.mxu0 0.0
    %290 = vmatpush1.msra.mxu0 %v194
    %291 = vmatprep.subr.mxu0 0.0
    %292 = vmatpush1.msra.mxu0 %v193
    %293 = vmatprep.subr.mxu0 0.0
    %294 = vmatpush1.msra.mxu0 %v192
    %295 = vmatprep.subr.mxu0 0.0
    %296 = vmatpush1.msra.mxu0 %v191
    %297 = vmatprep.subr.mxu0 0.0
    %298 = vmatpush1.msra.mxu0 %v190
    %299 = vmatprep.subr.mxu0 0.0
    %300 = vmatpush1.msra.mxu0 %v189
    %301 = vmatprep.subr.mxu0 0.0
    %302 = vmatpush1.msra.mxu0 %v188
    %303 = vmatprep.subr.mxu0 0.0
    %304 = vmatpush1.msra.mxu0 %v187
    %305 = vmatprep.subr.mxu0 0.0
    %306 = vmatpush1.msra.mxu0 %v186
    %307 = vmatprep.subr.mxu0 0.0
    %308 = vmatpush1.msra.mxu0 %v185
    %309 = vmatprep.subr.mxu0 0.0
    %310 = vmatpush1.msra.mxu0 %v184
    %311 = vmatprep.subr.mxu0 0.0
    %312 = vmatpush1.msra.mxu0 %v183
    %313 = vmatprep.subr.mxu0 0.0
    %314 = vmatpush1.msra.mxu0 %v182
    %315 = vmatprep.subr.mxu0 0.0
    %316 = vmatpush2.msra.mxu0 0.0
    %317 = vmatprep.subr.mxu0 0.0
    %318 = vmatpush2.msra.mxu0 0.0
    %319 = vmatprep.subr.mxu0 0.0
    %320 = vmatpush2.msra.mxu0 0.0
    %321 = vmatprep.subr.mxu0 0.0
    %322 = vmatpush2.msra.mxu0 0.0
    %323 = vmatprep.subr.mxu0 0.0
    %324 = vmatpush2.msra.mxu0 0.0
    %325 = vmatprep.subr.mxu0 0.0
    %326 = vmatpush2.msra.mxu0 0.0
    %327 = vmatprep.subr.mxu0 0.0
    %328 = vmatpush2.msra.mxu0 0.0
    %329 = vmatprep.subr.mxu0 0.0
    %330 = vmatpush2.msra.mxu0 0.0
    %331 = vmatprep.subr.mxu0 0.0
    %332 = vmatpush2.msra.mxu0 0.0
    %333 = vmatprep.subr.mxu0 0.0
    %334 = vmatpush2.msra.mxu0 0.0
    %335 = vmatprep.subr.mxu0 0.0
    %336 = vmatpush2.msra.mxu0 0.0
    %337 = vmatprep.subr.mxu0 0.0
    %338 = vmatpush2.msra.mxu0 0.0
    %339 = vmatprep.subr.mxu0 0.0
    %340 = vmatpush2.msra.mxu0 0.0
    %341 = vmatprep.subr.mxu0 0.0
    %342 = vmatpush2.msra.mxu0 0.0
    %343 = vmatprep.subr.mxu0 0.0
    %344 = vmatpush2.msra.mxu0 0.0
    %345 = vmatprep.subr.mxu0 0.0
    %346 = vmatpush2.msra.mxu0 0.0
    %347 = vmatprep.mubr.f32.mxu0 0.0
    %348 = vmatmul.mubr.f32.gmra.mxu0 %v146
    %v349 = vpop.f32.mrf.mxu0
    %v350 = vadd.f32 %v265, %v349
    %v351 = vpop.f32.mrf.mxu0
    %352 = vmatprep.mubr.f32.mxu0 0.0
    %353 = vmatmul.mubr.f32.gmra.mxu0 %v147
    %v354 = vpop.f32.mrf.mxu0
    %v355 = vadd.f32 %v270, %v354
    %v356 = vpop.f32.mrf.mxu0
    %357 = vmatprep.mubr.f32.mxu0 0.0
    %358 = vmatmul.mubr.f32.gmra.mxu0 %v148
    %v359 = vpop.f32.mrf.mxu0
    %v360 = vadd.f32 %v275, %v359
    %v361 = vpop.f32.mrf.mxu0
    %362 = vmatprep.mubr.f32.mxu0 0.0
    %363 = vmatmul.mubr.f32.gmra.mxu0 %v149
    %v364 = vpop.f32.mrf.mxu0
    %v365 = vadd.f32 %v280, %v364
    %v366 = vpop.f32.mrf.mxu0
    %367 = vdwg.mxu0
    %v368 = vadd.f32 %v350, %v355
    %v369 = vadd.f32 %v368, %v360
    %v370 = vadd.f32 %v369, %v365
    %v371 = vrot.slane %v370, 4
    %v372 = vadd.f32 %v370, %v371
    %v373 = vrot.slane %v372, 2
    %v374 = vadd.f32 %v372, %v373
    %v375 = vrot.slane %v374, 1
    %v376 = vadd.f32 %v374, %v375
    %v377 = vmul.f32 %v350, %v350
    %v378 = vmul.f32 %v355, %v355
    %v379 = vmul.f32 %v360, %v360
    %v380 = vmul.f32 %v365, %v365
    %v381 = vadd.f32 %v377, %v378
    %v382 = vadd.f32 %v381, %v379
    %v383 = vadd.f32 %v382, %v380
    %v384 = vrot.slane %v383, 4
    %v385 = vadd.f32 %v383, %v384
    %v386 = vrot.slane %v385, 2
    %v387 = vadd.f32 %v385, %v386
    %v388 = vrot.slane %v387, 1
    %v389 = vadd.f32 %v387, %v388
    %v390 = vmul.f32 %v376, 0.03125
    %v391 = vmul.f32 %v389, 0.03125
    %v392 = vmul.f32 %v390, %v390
    %v393 = vsub.f32 %v391, %v392
    %v394 = vmax.f32 %v393, 0.0
    %v395 = vadd.f32 %v394, 1e-05
    %v396 = vrsqrt.pop %v395
    %v397 = vmul.f32 %v47, %v396
    %v398 = vmul.f32 %v390, %v397
    %v399 = vsub.f32 %v48, %v398
    %v400 = vlaneseq
    %v401 = vshrl.u32 %v400, 7
    %v402 = vsub.s32 0, %v401
    %v403 = vrot.slane %v397, %v402
    %v404 = vmul.f32 %v350, %v403
    %v405 = vmul.f32 %v355, %v403
    %v406 = vmul.f32 %v360, %v403
    %v407 = vmul.f32 %v365, %v403
    %v408 = vlaneseq
    %v409 = vshrl.u32 %v408, 7
    %v410 = vsub.s32 0, %v409
    %v411 = vrot.slane %v399, %v410
    %v412 = vadd.f32 %v404, %v411
    %v413 = vadd.f32 %v405, %v411
    %v414 = vadd.f32 %v406, %v411
    %v415 = vadd.f32 %v407, %v411
    %vm416 = vcmp.gt.f32.partialorder %v412, 0.0
    %vm417 = vcmp.gt.f32.partialorder %v413, 0.0
    %vm418 = vcmp.gt.f32.partialorder %v414, 0.0
    %vm419 = vcmp.gt.f32.partialorder %v415, 0.0
    %v420 = vmin.f32 %v412, 0.0
    %v421 = vmin.f32 %v413, 0.0
    %v422 = vmin.f32 %v414, 0.0
    %v423 = vmin.f32 %v415, 0.0
    %v424 = vmul.f32 %v420, 1.442695
    %v425 = vpow.pop %v424
    %v426 = vmul.f32 %v421, 1.442695
    %v427 = vpow.pop %v426
    %v428 = vmul.f32 %v422, 1.442695
    %v429 = vpow.pop %v428
    %v430 = vmul.f32 %v423, 1.442695
    %v431 = vpow.pop %v430
    %v432 = vsub.f32 %v425, 1.0
    %v433 = vsub.f32 %v427, 1.0
    %v434 = vsub.f32 %v429, 1.0
    %v435 = vsub.f32 %v431, 1.0
    %v436 = vsel %vm416, %v412, %v432
    %v437 = vsel %vm417, %v413, %v433
    %v438 = vsel %vm418, %v414, %v434
    %v439 = vsel %vm419, %v415, %v435
    %440 = vst [vmem:[#allocation2] sm:$0xff] %v436
    %441 = vst [vmem:[#allocation2 + $0x8] sm:$0xff] %v437
    %442 = vst [vmem:[#allocation2 + $0x10] sm:$0xff] %v438
    %443 = vst [vmem:[#allocation2 + $0x18] sm:$0xff] %v439
    %v444 = vld [vmem:[#allocation2] ss:$2 sm:$0xff]
    %s445 = scalar_lea.vmem [#allocation2], 16
    %v446 = vld [vmem:[%s445] ss:$2 sm:$0xff]
    %s447 = scalar_lea.vmem [#allocation2], 1
    %v448 = vld [vmem:[%s447] ss:$2 sm:$0xff]
    %s449 = scalar_lea.vmem [#allocation2], 17
    %v450 = vld [vmem:[%s449] ss:$2 sm:$0xff]
    %vm451 = vcmp.lt.s32.totalorder %v50, 0
    %v452 = vsub.s32 0, %v50
    %v453 = vsel %vm451, %v452, %v50
    %v454 = vshrl.u32 %v453, 3
    %v455 = vand.u32 %v453, 7
    %v456 = vsub.s32 0, %v455
    %v457 = vsel %vm451, %v456, %v455
    %vm458 = vcmp.lt.s32.totalorder %v51, 0
    %v459 = vsub.s32 0, %v51
    %v460 = vsel %vm458, %v459, %v51
    %v461 = vshrl.u32 %v460, 3
    %v462 = vand.u32 %v460, 7
    %v463 = vsub.s32 0, %v462
    %v464 = vsel %vm458, %v463, %v462
    %vm465 = vcmp.ne.s32.totalorder %v457, 0
    %vm466 = vcmp.ne.s32.totalorder %v464, 0
    %vm467 = vcmp.lt.s32.totalorder %v457, 0
    %vm468 = vcmp.lt.s32.totalorder %v464, 0
    %vm469 = vmand %vm467, %vm465
    %vm470 = vmand %vm468, %vm466
    %v471 = vadd.s32 %v457, 8
    %v472 = vadd.s32 %v464, 8
    %v473 = vsel %vm469, %v471, %v457
    %v474 = vsel %vm470, %v472, %v464
    %vm475 = vcmp.eq.s32.totalorder %v473, 0
    %vm476 = vcmp.eq.s32.totalorder %v474, 0
    %v478 = vrot.slane %v450, 7
    %v481 = vrot.slane %v448, 7
    %v482 = vsel %vm109, %v481, %v478
    %v485 = vsel %vm109, %v478, %v481
    %v486 = vsel %vm475, -inf, %v485
    %v487 = vsel %vm476, -inf, %v482
    %v488 = vmax.f32 %v444, %v448
    %v489 = vmax.f32 %v446, %v450
    %v490 = vmax.f32 %v488, %v486
    %v491 = vmax.f32 %v489, %v487
    %492 = vst [vmem:[#allocation8] sm:$0xff] %v490
    %493 = vst [vmem:[#allocation8 + $0x8] sm:$0xff] %v491
    // Predicated region
    $region22: #{tpu_custom_call.1} parent=1 // pred_check
      _
    $region23: #{tpu_custom_call.1} parent=1 // pred_check_branch
      %495 = sbr.rel (0) target = $region25
    $region24: #{tpu_custom_call.1} parent=1 // pred_region
      %s497 = ssub.s32 256, 256
      %498 = vsyncadd [#allocation5], %s497
      %s499 = sshll.u32 [#allocation8], 4
      %s500 = int_to_ptr.vmem [resolvable:$true] %s499
      %505 = dma.vmem_to_hbm [thread:$0]  %s500, 256, %s3, [#allocation5], 128, 128, 8
    $region25: #{tpu_custom_call.1} parent=1 // pred_fallthru
      _
    // Predicated region
    $region26: #{tpu_custom_call.1} parent=1 // pred_check
      _
    $region27: #{tpu_custom_call.1} parent=1 // pred_check_branch
      %507 = sbr.rel (0) target = $region29
    $region28: #{tpu_custom_call.1} parent=1 // pred_region
      %508 = dma.done [#allocation5], 256
    $region29: #{tpu_custom_call.1} parent=1 // pred_fallthru
      _
    %509 = vsyncpa [#allocation4], 1
    %510 = vsyncpa [#allocation7], 1
    %511 = vsyncpa [#allocation5], 1

</llo_original>
